<compile_context>
chip_gen: v7x
topology: tpu7x:2x2x1
jax: 0.10.0
libtpu: 0.0.40
codegen_flags: <defaults>
</compile_context>

<pallas_src>
import math
from functools import partial

import jax
import jax.numpy as jnp
from jax.experimental import pallas as pl
from jax.experimental.pallas import tpu as pltpu


def _interp_matrix(in_size: int, out_size: int, scale: float) -> jnp.ndarray:
    """Row-interpolation matrix (out_size, in_size), align_corners=False bilinear."""
    dst = jnp.arange(out_size, dtype=jnp.float32)
    src = (dst + 0.5) / scale - 0.5
    src = jnp.clip(src, 0.0, float(in_size - 1))
    lo = jnp.floor(src).astype(jnp.int32)
    hi = jnp.minimum(lo + 1, in_size - 1)
    frac = src - lo.astype(jnp.float32)
    rows = jnp.arange(out_size)
    w = jnp.zeros((out_size, in_size), jnp.float32)
    w = w.at[rows, lo].add(1.0 - frac)
    w = w.at[rows, hi].add(frac)
    return w


def _upsample_kernel(wwt_ref, x_ref, o_ref, *, h: int, scale: int):
    # wwt_ref: (W, s*W)     tiny width-interpolation matrix (transposed), shared by all steps
    # x_ref:   (TR, W)      TR = BC*H rows = BC whole (n, c) planes
    # o_ref:   (TR, s*s*W)  for input row i, the s output rows s*i+p live side by side
    x = x_ref[...]

    # ---- width pass: one small matmul does blend + lane interleave + edge clamping ----
    xw = jnp.dot(x, wwt_ref[...], preferred_element_type=jnp.float32)  # (TR, s*W) f32

    # ---- height pass: pure-VPU stencil along rows (sublane dim) ----
    tr = xw.shape[0]
    row_in_plane = jax.lax.broadcasted_iota(jnp.int32, (tr, 1), 0) % h
    # rows r-1 / r+1 with clamping at every plane boundary; the clamp also guarantees that
    # garbage rows of a ragged last block never blend into in-bounds output rows.
    up = jnp.concatenate([xw[:1], xw[:-1]], axis=0)
    up = jnp.where(row_in_plane == 0, xw, up)
    down = jnp.concatenate([xw[1:], xw[-1:]], axis=0)
    down = jnp.where(row_in_plane == h - 1, xw, down)

    variants = []
    for p in range(scale):
        f = (p + 0.5) / scale - 0.5            # source offset of output row s*i + p
        if f < 0.0:
            v = (-f) * up + (1.0 + f) * xw     # s=2, p=0: 0.25*x[i-1] + 0.75*x[i]
        else:
            v = (1.0 - f) * xw + f * down      # s=2, p=1: 0.75*x[i] + 0.25*x[i+1]
        variants.append(v)

    # Single full-width (lane-dense, unmasked) store of the whole output block row.
    o_ref[...] = jnp.concatenate(variants, axis=1).astype(o_ref.dtype)


def _choose_block_planes(nc: int, h: int, per_plane_bytes: int,
                         budget_bytes: int, pack: int) -> int:
    """#planes per grid step: multiple of the sublane packing, sized to the VMEM budget."""
    bc_unit = pack // math.gcd(h, pack)         # BC*H must be a multiple of `pack`
    if nc <= bc_unit:
        return nc                                # single block (block dims == array dims)
    bc_cap = (nc // bc_unit) * bc_unit
    bc = (budget_bytes // max(per_plane_bytes, 1)) // bc_unit * bc_unit
    bc = max(bc_unit, min(bc, bc_cap))
    # v7x megacore: prefer >= 4 grid steps (2 TCs x double buffering) once blocks can stay
    # >= ~512 rows; below that keep blocks big (per-step overhead ~0.35us, DMA size).
    planes_512 = -(-512 // h)                    # ceil(512 / h)
    min_split = -(-planes_512 // bc_unit) * bc_unit
    quarter = (nc // 4) // bc_unit * bc_unit
    if quarter >= min_split:
        bc = min(bc, quarter)
    return int(max(bc_unit, bc))


def upsample_bilinear(x: jnp.ndarray, scale_factor: int = 2) -> jnp.ndarray:
    """Equivalent of UpSample(scale_factor, mode='bilinear')(x) for NCHW input."""
    n, c, h, w = x.shape
    s = int(scale_factor)
    assert s >= 1 and s == scale_factor, "only integer scale factors are supported"
    h_out, w_out = h * s, w * s
    nc, rows = n * c, n * c * h

    # Tiny width-interpolation matrix (W, s*W); exact in bf16 for s=2, else kept f32.
    weight_dtype = jnp.bfloat16 if (x.dtype == jnp.bfloat16 and s == 2) else jnp.float32
    wwt = _interp_matrix(w, w_out, float(s)).T.astype(weight_dtype)     # (W, W_out)

    x_rows = x.reshape(rows, w)       # free row-major reshape of NCHW, no data movement

    itemsize = jnp.dtype(x.dtype).itemsize
    pack = max(8, 8 * (4 // itemsize))            # sublane packing: 8 f32 / 16 bf16 / 32 i8

    # VMEM budget from the actual chip (v5e/v6e 128 MiB, v7x 64 MiB).
    try:
        vmem_cap = int(pltpu.get_tpu_info().vmem_capacity_bytes)
    except Exception:
        vmem_cap = 64 * 1024 * 1024
    vmem_limit = int(min(vmem_cap * 3 // 4, 100 * 1024 * 1024))

    weight_bytes = w * w_out * jnp.dtype(weight_dtype).itemsize
    # Double-buffered in/out blocks + f32 intermediates of the stencil, per plane.
    per_plane = (2 * h * w * itemsize                 # input block  (x2 buffers)
                 + 2 * h * s * s * w * itemsize       # output block (x2 buffers)
                 + 4 * h * w_out * 4                  # xw / up / down / variant f32 temps
                 + 2 * h * s * w_out * 4)             # pre-cast concat result (f32)
    budget = max(per_plane, vmem_limit * 55 // 100 - 2 * weight_bytes)

    bc = _choose_block_planes(nc, h, per_plane, budget, pack)
    tr = bc * h
    num_blocks = pl.cdiv(nc, bc)                  # ragged last block: no wrapper-side pad

    flops = 2 * rows * w * w_out + 3 * rows * s * w_out
    bytes_accessed = rows * w * itemsize + rows * s * s * w * itemsize + weight_bytes

    out_rows = pl.pallas_call(
        partial(_upsample_kernel, h=h, scale=s),
        out_shape=jax.ShapeDtypeStruct((rows, s * s * w), x.dtype),
        grid_spec=pltpu.PrefetchScalarGridSpec(
            num_scalar_prefetch=0,
            grid=(num_blocks,),
            in_specs=[
                # tiny shared width matrix: constant block index -> fetched once, reused
                pl.BlockSpec((w, w_out), lambda b: (0, 0)),
                # BC whole planes per step; lane dim == full array width (contiguous DMA)
                pl.BlockSpec((tr, w), lambda b: (b, 0)),
            ],
            out_specs=pl.BlockSpec((tr, s * s * w), lambda b: (b, 0)),
        ),
        compiler_params=pltpu.CompilerParams(
            dimension_semantics=("parallel",),
            vmem_limit_bytes=vmem_limit,
        ),
        cost_estimate=pl.CostEstimate(
            flops=int(flops), transcendentals=0, bytes_accessed=int(bytes_accessed)),
    )(wwt, x_rows)

    # Row-variant layout makes this a pure (free) row-major reshape back to NCHW.
    return out_rows.reshape(n, c, h_out, w_out)


if __name__ == "__main__":
    key = jax.random.PRNGKey(0)
    x = jax.random.normal(key, (2, 4, 16, 16), dtype=jnp.float32)

    y = upsample_bilinear(x, scale_factor=2)
    jax.block_until_ready(y)

    assert y.shape == (2, 4, 32, 32), y.shape
    assert y.dtype == x.dtype

    # Sanity check against pure-JAX separable-bilinear reference (align_corners=False).
    wh = _interp_matrix(16, 32, 2.0)
    ww = _interp_matrix(16, 32, 2.0)
    ref = jnp.einsum("oi,ncij,pj->ncop", wh, x, ww)
    err = float(jnp.max(jnp.abs(y - ref)))
    assert err < 2e-4, err

    print("KERNEL_OK")
</pallas_src>

<mosaic_0001>
module attributes {stable_mosaic.version = 11 : i64} {
  func.func @_upsample_kernel(%arg0: i32, %arg1: memref<16x32xf32, #tpu.memory_space<vmem>>, %arg2: memref<128x16xf32, #tpu.memory_space<vmem>>, %arg3: memref<128x64xf32, #tpu.memory_space<vmem>>) attributes {dimension_semantics = [#tpu.dimension_semantics<parallel>], iteration_bounds = array<i64: 1>, scalar_prefetch = 0 : i64, scratch_operands = 0 : i64, tpu.core_type = #tpu.core_type<tc>, window_params = [{pipeline_mode = #tpu.pipeline_mode<synchronous>, transform_indices = @transform_0, window_bounds = array<i64: 16, 32>}, {transform_indices = @transform_1, window_bounds = array<i64: 128, 16>}, {transform_indices = @transform_2, window_bounds = array<i64: 128, 64>}]} {
    %c0 = arith.constant 0 : index
    %c0_0 = arith.constant 0 : index
    %0 = vector.load %arg2[%c0, %c0_0] : memref<128x16xf32, #tpu.memory_space<vmem>>, vector<128x16xf32>
    %c0_1 = arith.constant 0 : index
    %c0_2 = arith.constant 0 : index
    %1 = vector.load %arg1[%c0_1, %c0_2] : memref<16x32xf32, #tpu.memory_space<vmem>>, vector<16x32xf32>
    %cst = arith.constant dense<0.000000e+00> : vector<128x32xf32>
    %2 = tpu.matmul %0, %1, %cst {dimension_numbers = #tpu.dot_dimension_numbers<[1], [0], [0], [1], [0, 0, 1, 1], [], []>} : vector<128x16xf32>, vector<16x32xf32>, vector<128x32xf32> -> vector<128x32xf32>
    %3 = tpu.iota {dimensions = array<i32: 0>} : vector<128x1xi32>
    %c16_i32 = arith.constant 16 : i32
    %c0_i32 = arith.constant 0 : i32
    %4 = arith.cmpi eq, %c16_i32, %c0_i32 : i32
    %c1_i32 = arith.constant 1 : i32
    %5 = arith.select %4, %c1_i32, %c16_i32 : i32
    %6 = vector.broadcast %5 : i32 to vector<128x1xi32>
    %7 = arith.remsi %3, %6 : vector<128x1xi32>
    %c0_i32_3 = arith.constant 0 : i32
    %8 = vector.broadcast %c0_i32_3 : i32 to vector<128x1xi32>
    %9 = arith.cmpi ne, %7, %8 : vector<128x1xi32>
    %c0_i32_4 = arith.constant 0 : i32
    %10 = vector.broadcast %c0_i32_4 : i32 to vector<128x1xi32>
    %11 = arith.cmpi slt, %7, %10 : vector<128x1xi32>
    %c0_i32_5 = arith.constant 0 : i32
    %12 = arith.cmpi slt, %5, %c0_i32_5 : i32
    %13 = vector.broadcast %12 : i1 to vector<128x1xi1>
    %14 = vector.broadcast %13 : vector<128x1xi1> to vector<128x1xi1>
    %15 = arith.xori %11, %14 : vector<128x1xi1>
    %16 = arith.andi %15, %9 : vector<128x1xi1>
    %17 = vector.broadcast %5 : i32 to vector<128x1xi32>
    %18 = arith.addi %7, %17 : vector<128x1xi32>
    %19 = arith.select %16, %18, %7 : vector<128x1xi1>, vector<128x1xi32>
    %20 = vector.extract_strided_slice %2 {offsets = [0, 0], sizes = [1, 32], strides = [1, 1]} : vector<128x32xf32> to vector<1x32xf32>
    %21 = vector.extract_strided_slice %2 {offsets = [0, 0], sizes = [127, 32], strides = [1, 1]} : vector<128x32xf32> to vector<127x32xf32>
    %22 = tpu.concatenate %20, %21 in 0 : vector<1x32xf32>, vector<127x32xf32> -> vector<128x32xf32>
    %c0_i32_6 = arith.constant 0 : i32
    %23 = vector.broadcast %c0_i32_6 : i32 to vector<128x1xi32>
    %24 = arith.cmpi eq, %19, %23 : vector<128x1xi32>
    %25 = vector.shape_cast %24 : vector<128x1xi1> to vector<128x1xi1>
    %26 = vector.broadcast %25 : vector<128x1xi1> to vector<128x32xi1>
    %27 = arith.select %26, %2, %22 : vector<128x32xi1>, vector<128x32xf32>
    %28 = vector.extract_strided_slice %2 {offsets = [1, 0], sizes = [127, 32], strides = [1, 1]} : vector<128x32xf32> to vector<127x32xf32>
    %29 = vector.extract_strided_slice %2 {offsets = [127, 0], sizes = [1, 32], strides = [1, 1]} : vector<128x32xf32> to vector<1x32xf32>
    %30 = tpu.concatenate %28, %29 in 0 : vector<127x32xf32>, vector<1x32xf32> -> vector<128x32xf32>
    %c15_i32 = arith.constant 15 : i32
    %31 = vector.broadcast %c15_i32 : i32 to vector<128x1xi32>
    %32 = arith.cmpi eq, %19, %31 : vector<128x1xi32>
    %33 = vector.shape_cast %32 : vector<128x1xi1> to vector<128x1xi1>
    %34 = vector.broadcast %33 : vector<128x1xi1> to vector<128x32xi1>
    %35 = arith.select %34, %2, %30 : vector<128x32xi1>, vector<128x32xf32>
    %cst_7 = arith.constant 2.500000e-01 : f32
    %36 = vector.broadcast %cst_7 : f32 to vector<128x32xf32>
    %37 = arith.mulf %36, %27 : vector<128x32xf32>
    %cst_8 = arith.constant 7.500000e-01 : f32
    %38 = vector.broadcast %cst_8 : f32 to vector<128x32xf32>
    %39 = arith.mulf %38, %2 : vector<128x32xf32>
    %40 = arith.addf %37, %39 : vector<128x32xf32>
    %cst_9 = arith.constant 7.500000e-01 : f32
    %41 = vector.broadcast %cst_9 : f32 to vector<128x32xf32>
    %42 = arith.mulf %41, %2 : vector<128x32xf32>
    %cst_10 = arith.constant 2.500000e-01 : f32
    %43 = vector.broadcast %cst_10 : f32 to vector<128x32xf32>
    %44 = arith.mulf %43, %35 : vector<128x32xf32>
    %45 = arith.addf %42, %44 : vector<128x32xf32>
    %46 = tpu.concatenate %40, %45 in 1 : vector<128x32xf32>, vector<128x32xf32> -> vector<128x64xf32>
    %c0_11 = arith.constant 0 : index
    %c0_12 = arith.constant 0 : index
    %47 = vector.load %arg3[%c0_11, %c0_12] : memref<128x64xf32, #tpu.memory_space<vmem>>, vector<128x64xf32>
    tpu.vector_store %arg3[%c0_11, %c0_12], %46 {strides = array<i32>} : memref<128x64xf32, #tpu.memory_space<vmem>>, vector<128x64xf32>,
    return
  }
  func.func @transform_0(%arg0: i32) -> (i32, i32) {
    %c0_i32 = arith.constant 0 : i32
    %c0_i32_0 = arith.constant 0 : i32
    %c0_i32_1 = arith.constant 0 : i32
    return %c0_i32, %c0_i32_0 : i32, i32
  }
  func.func @transform_1(%arg0: i32) -> (i32, i32) {
    %c0_i32 = arith.constant 0 : i32
    %c0_i32_0 = arith.constant 0 : i32
    return %arg0, %c0_i32 : i32, i32
  }
  func.func @transform_2(%arg0: i32) -> (i32, i32) {
    %c0_i32 = arith.constant 0 : i32
    %c0_i32_0 = arith.constant 0 : i32
    return %arg0, %c0_i32 : i32, i32
  }
}

</mosaic_0001>

<llo_original>
// kernel: tpu_custom_call.1
$region0: #{tpu_custom_call.1}
  #allocation0 [shape = 'u32[]', space=smem, size = 0x4, offset = 0x4, fixed_abs, tag = 'smem constant byte address 0x4 - core index']
  #allocation1 [shape = 'u32[144,128]{1,0:T(1,128)}', space=vmem, size = 0x12000, scoped, tag = 'internal scratch']
  %s0 = inlined_call_operand.vmem [shape: f32[16,32], index: 0, kind: input, shape index: {}]
  %s1 = inlined_call_operand.vmem [shape: f32[128,16], index: 1, kind: input, shape index: {}]
  %s2 = inlined_call_operand.vmem [shape: f32[128,64], index: 2, kind: output, shape index: {}]
  %s3 = sld [smem:[#allocation0]]
  $region18: #{tpu_custom_call.1} parent=0
    _
  %s5 = ssub.s32 1, %s3
  %s6 = scalar_select 0, %s5, %s3
  // Predicated region
  $region2: #{tpu_custom_call.1} parent=0 // pred_check
    _
  $region3: #{tpu_custom_call.1} parent=0 // pred_check_branch
    %8 = sbr.rel (0) target = $region5
  $region4: #{tpu_custom_call.1} parent=0 // pred_region
    _
  $region5: #{tpu_custom_call.1} parent=0 // pred_fallthru
    _
  // Predicated region
  $region6: #{tpu_custom_call.1} parent=0 // pred_check
    _
  $region7: #{tpu_custom_call.1} parent=0 // pred_check_branch
    %10 = sbr.rel (0) target = $region9
  $region8: #{tpu_custom_call.1} parent=0 // pred_region
    _
  $region9: #{tpu_custom_call.1} parent=0 // pred_fallthru
    _
  %v11 = vld [vmem:[%s1] sm:$0xff]
  %v12 = vld [vmem:[%s1 + $0x8] sm:$0xff]
  %v13 = vld [vmem:[%s1 + $0x10] sm:$0xff]
  %v14 = vld [vmem:[%s1 + $0x18] sm:$0xff]
  %v15 = vld [vmem:[%s1 + $0x20] sm:$0xff]
  %v16 = vld [vmem:[%s1 + $0x28] sm:$0xff]
  %v17 = vld [vmem:[%s1 + $0x30] sm:$0xff]
  %v18 = vld [vmem:[%s1 + $0x38] sm:$0xff]
  %v19 = vld [vmem:[%s1 + $0x40] sm:$0xff]
  %v20 = vld [vmem:[%s1 + $0x48] sm:$0xff]
  %v21 = vld [vmem:[%s1 + $0x50] sm:$0xff]
  %v22 = vld [vmem:[%s1 + $0x58] sm:$0xff]
  %v23 = vld [vmem:[%s1 + $0x60] sm:$0xff]
  %v24 = vld [vmem:[%s1 + $0x68] sm:$0xff]
  %v25 = vld [vmem:[%s1 + $0x70] sm:$0xff]
  %v26 = vld [vmem:[%s1 + $0x78] sm:$0xff]
  %v27 = vld [vmem:[%s0] sm:$0xff]
  %v28 = vld [vmem:[%s0 + $0x8] sm:$0xff]
  %vm29 = vcmask 130048
  %v31 = vsel %vm29, %v11, 0
  %v34 = vsel %vm29, %v12, 0
  %v37 = vsel %vm29, %v13, 0
  %v40 = vsel %vm29, %v14, 0
  %v43 = vsel %vm29, %v15, 0
  %v46 = vsel %vm29, %v16, 0
  %v49 = vsel %vm29, %v17, 0
  %v52 = vsel %vm29, %v18, 0
  %v55 = vsel %vm29, %v19, 0
  %v58 = vsel %vm29, %v20, 0
  %v61 = vsel %vm29, %v21, 0
  %v64 = vsel %vm29, %v22, 0
  %v67 = vsel %vm29, %v23, 0
  %v70 = vsel %vm29, %v24, 0
  %v73 = vsel %vm29, %v25, 0
  %v76 = vsel %vm29, %v26, 0
  %78 = vmatprep.subr.mxu0 0.0
  %79 = vmatpush1.msra.mxu0 %v27
  %80 = vmatprep.subr.mxu0 0.0
  %81 = vmatpush1.msra.mxu0 %v28
  %82 = vmatprep.subr.mxu0 0.0
  %83 = vmatpush1.msra.mxu0 0.0
  %84 = vmatprep.subr.mxu0 0.0
  %85 = vmatpush1.msra.mxu0 0.0
  %86 = vmatprep.subr.mxu0 0.0
  %87 = vmatpush1.msra.mxu0 0.0
  %88 = vmatprep.subr.mxu0 0.0
  %89 = vmatpush1.msra.mxu0 0.0
  %90 = vmatprep.subr.mxu0 0.0
  %91 = vmatpush1.msra.mxu0 0.0
  %92 = vmatprep.subr.mxu0 0.0
  %93 = vmatpush1.msra.mxu0 0.0
  %94 = vmatprep.subr.mxu0 0.0
  %95 = vmatpush1.msra.mxu0 0.0
  %96 = vmatprep.subr.mxu0 0.0
  %97 = vmatpush1.msra.mxu0 0.0
  %98 = vmatprep.subr.mxu0 0.0
  %99 = vmatpush1.msra.mxu0 0.0
  %100 = vmatprep.subr.mxu0 0.0
  %101 = vmatpush1.msra.mxu0 0.0
  %102 = vmatprep.subr.mxu0 0.0
  %103 = vmatpush1.msra.mxu0 0.0
  %104 = vmatprep.subr.mxu0 0.0
  %105 = vmatpush1.msra.mxu0 0.0
  %106 = vmatprep.subr.mxu0 0.0
  %107 = vmatpush1.msra.mxu0 0.0
  %108 = vmatprep.subr.mxu0 0.0
  %109 = vmatpush1.msra.mxu0 0.0
  %110 = vmatprep.subr.mxu0 0.0
  %111 = vmatpush1.msra.mxu0 0.0
  %112 = vmatprep.subr.mxu0 0.0
  %113 = vmatpush1.msra.mxu0 0.0
  %114 = vmatprep.subr.mxu0 0.0
  %115 = vmatpush1.msra.mxu0 0.0
  %116 = vmatprep.subr.mxu0 0.0
  %117 = vmatpush1.msra.mxu0 0.0
  %118 = vmatprep.subr.mxu0 0.0
  %119 = vmatpush1.msra.mxu0 0.0
  %120 = vmatprep.subr.mxu0 0.0
  %121 = vmatpush1.msra.mxu0 0.0
  %122 = vmatprep.subr.mxu0 0.0
  %123 = vmatpush1.msra.mxu0 0.0
  %124 = vmatprep.subr.mxu0 0.0
  %125 = vmatpush1.msra.mxu0 0.0
  %126 = vmatprep.subr.mxu0 0.0
  %127 = vmatpush1.msra.mxu0 0.0
  %128 = vmatprep.subr.mxu0 0.0
  %129 = vmatpush1.msra.mxu0 0.0
  %130 = vmatprep.subr.mxu0 0.0
  %131 = vmatpush1.msra.mxu0 0.0
  %132 = vmatprep.subr.mxu0 0.0
  %133 = vmatpush1.msra.mxu0 0.0
  %134 = vmatprep.subr.mxu0 0.0
  %135 = vmatpush1.msra.mxu0 0.0
  %136 = vmatprep.subr.mxu0 0.0
  %137 = vmatpush1.msra.mxu0 0.0
  %138 = vmatprep.subr.mxu0 0.0
  %139 = vmatpush1.msra.mxu0 0.0
  %140 = vmatprep.subr.mxu0 0.0
  %141 = vmatpush1.msra.mxu0 0.0
  %142 = vmatprep.mubr.f32.mxu0 0.0
  %143 = vmatmul.mubr.f32.gmra.mrb[0].mxu0 %v31
  %v144 = vpop.f32.mrb[0].mxu0
  %v145 = vadd.f32 0.0, %v144
  %v146 = vpop.f32.mrb[0].mxu0
  %147 = vmatprep.mubr.f32.mxu0 0.0
  %148 = vmatmul.mubr.f32.gmra.mrb[0].mxu0 %v34
  %v149 = vpop.f32.mrb[0].mxu0
  %v150 = vadd.f32 0.0, %v149
  %v151 = vpop.f32.mrb[0].mxu0
  %152 = vmatprep.mubr.f32.mxu0 0.0
  %153 = vmatmul.mubr.f32.gmra.mrb[0].mxu0 %v37
  %v154 = vpop.f32.mrb[0].mxu0
  %v155 = vadd.f32 0.0, %v154
  %v156 = vpop.f32.mrb[0].mxu0
  %157 = vmatprep.mubr.f32.mxu0 0.0
  %158 = vmatmul.mubr.f32.gmra.mrb[0].mxu0 %v40
  %v159 = vpop.f32.mrb[0].mxu0
  %v160 = vadd.f32 0.0, %v159
  %v161 = vpop.f32.mrb[0].mxu0
  %162 = vmatprep.mubr.f32.mxu0 0.0
  %163 = vmatmul.mubr.f32.gmra.mrb[0].mxu0 %v43
  %v164 = vpop.f32.mrb[0].mxu0
  %v165 = vadd.f32 0.0, %v164
  %v166 = vpop.f32.mrb[0].mxu0
  %167 = vmatprep.mubr.f32.mxu0 0.0
  %168 = vmatmul.mubr.f32.gmra.mrb[0].mxu0 %v46
  %v169 = vpop.f32.mrb[0].mxu0
  %v170 = vadd.f32 0.0, %v169
  %v171 = vpop.f32.mrb[0].mxu0
  %172 = vmatprep.mubr.f32.mxu0 0.0
  %173 = vmatmul.mubr.f32.gmra.mrb[0].mxu0 %v49
  %v174 = vpop.f32.mrb[0].mxu0
  %v175 = vadd.f32 0.0, %v174
  %v176 = vpop.f32.mrb[0].mxu0
  %177 = vmatprep.mubr.f32.mxu0 0.0
  %178 = vmatmul.mubr.f32.gmra.mrb[0].mxu0 %v52
  %v179 = vpop.f32.mrb[0].mxu0
  %v180 = vadd.f32 0.0, %v179
  %v181 = vpop.f32.mrb[0].mxu0
  %182 = vmatprep.mubr.f32.mxu0 0.0
  %183 = vmatmul.mubr.f32.gmra.mrb[0].mxu0 %v55
  %v184 = vpop.f32.mrb[0].mxu0
  %v185 = vadd.f32 0.0, %v184
  %v186 = vpop.f32.mrb[0].mxu0
  %187 = vmatprep.mubr.f32.mxu0 0.0
  %188 = vmatmul.mubr.f32.gmra.mrb[0].mxu0 %v58
  %v189 = vpop.f32.mrb[0].mxu0
  %v190 = vadd.f32 0.0, %v189
  %v191 = vpop.f32.mrb[0].mxu0
  %192 = vmatprep.mubr.f32.mxu0 0.0
  %193 = vmatmul.mubr.f32.gmra.mrb[0].mxu0 %v61
  %v194 = vpop.f32.mrb[0].mxu0
  %v195 = vadd.f32 0.0, %v194
  %v196 = vpop.f32.mrb[0].mxu0
  %197 = vmatprep.mubr.f32.mxu0 0.0
  %198 = vmatmul.mubr.f32.gmra.mrb[0].mxu0 %v64
  %v199 = vpop.f32.mrb[0].mxu0
  %v200 = vadd.f32 0.0, %v199
  %v201 = vpop.f32.mrb[0].mxu0
  %202 = vmatprep.mubr.f32.mxu0 0.0
  %203 = vmatmul.mubr.f32.gmra.mrb[0].mxu0 %v67
  %v204 = vpop.f32.mrb[0].mxu0
  %v205 = vadd.f32 0.0, %v204
  %v206 = vpop.f32.mrb[0].mxu0
  %207 = vmatprep.mubr.f32.mxu0 0.0
  %208 = vmatmul.mubr.f32.gmra.mrb[0].mxu0 %v70
  %v209 = vpop.f32.mrb[0].mxu0
  %v210 = vadd.f32 0.0, %v209
  %v211 = vpop.f32.mrb[0].mxu0
  %212 = vmatprep.mubr.f32.mxu0 0.0
  %213 = vmatmul.mubr.f32.gmra.mrb[0].mxu0 %v73
  %v214 = vpop.f32.mrb[0].mxu0
  %v215 = vadd.f32 0.0, %v214
  %v216 = vpop.f32.mrb[0].mxu0
  %217 = vmatprep.mubr.f32.mxu0 0.0
  %218 = vmatmul.mubr.f32.gmra.mrb[0].mxu0 %v76
  %v219 = vpop.f32.mrb[0].mxu0
  %v220 = vadd.f32 0.0, %v219
  %v221 = vpop.f32.mrb[0].mxu0
  %222 = vdwg.mxu0
  %v223 = vlaneseq
  %v224 = vshrl.u32 %v223, 7
  %v225 = vadd.s32 %v224, 8
  %v226 = vadd.s32 %v224, 16
  %v227 = vadd.s32 %v224, 24
  %v228 = vadd.s32 %v224, 32
  %v229 = vadd.s32 %v224, 40
  %v230 = vadd.s32 %v224, 48
  %v231 = vadd.s32 %v224, 56
  %v232 = vadd.s32 %v224, 64
  %v233 = vadd.s32 %v224, 72
  %v234 = vadd.s32 %v224, 80
  %v235 = vadd.s32 %v224, 88
  %v236 = vadd.s32 %v224, 96
  %v237 = vadd.s32 %v224, 104
  %v238 = vadd.s32 %v224, 112
  %v239 = vadd.s32 %v224, 120
  %vm240 = vcmp.lt.s32.totalorder %v224, 0
  %v241 = vsub.s32 0, %v224
  %v242 = vsel %vm240, %v241, %v224
  %v243 = vshrl.u32 %v242, 4
  %v244 = vand.u32 %v242, 15
  %v245 = vsub.s32 0, %v244
  %v246 = vsel %vm240, %v245, %v244
  %vm247 = vcmp.lt.s32.totalorder %v225, 0
  %v248 = vsub.s32 0, %v225
  %v249 = vsel %vm247, %v248, %v225
  %v250 = vshrl.u32 %v249, 4
  %v251 = vand.u32 %v249, 15
  %v252 = vsub.s32 0, %v251
  %v253 = vsel %vm247, %v252, %v251
  %vm254 = vcmp.lt.s32.totalorder %v226, 0
  %v255 = vsub.s32 0, %v226
  %v256 = vsel %vm254, %v255, %v226
  %v257 = vshrl.u32 %v256, 4
  %v258 = vand.u32 %v256, 15
  %v259 = vsub.s32 0, %v258
  %v260 = vsel %vm254, %v259, %v258
  %vm261 = vcmp.lt.s32.totalorder %v227, 0
  %v262 = vsub.s32 0, %v227
  %v263 = vsel %vm261, %v262, %v227
  %v264 = vshrl.u32 %v263, 4
  %v265 = vand.u32 %v263, 15
  %v266 = vsub.s32 0, %v265
  %v267 = vsel %vm261, %v266, %v265
  %vm268 = vcmp.lt.s32.totalorder %v228, 0
  %v269 = vsub.s32 0, %v228
  %v270 = vsel %vm268, %v269, %v228
  %v271 = vshrl.u32 %v270, 4
  %v272 = vand.u32 %v270, 15
  %v273 = vsub.s32 0, %v272
  %v274 = vsel %vm268, %v273, %v272
  %vm275 = vcmp.lt.s32.totalorder %v229, 0
  %v276 = vsub.s32 0, %v229
  %v277 = vsel %vm275, %v276, %v229
  %v278 = vshrl.u32 %v277, 4
  %v279 = vand.u32 %v277, 15
  %v280 = vsub.s32 0, %v279
  %v281 = vsel %vm275, %v280, %v279
  %vm282 = vcmp.lt.s32.totalorder %v230, 0
  %v283 = vsub.s32 0, %v230
  %v284 = vsel %vm282, %v283, %v230
  %v285 = vshrl.u32 %v284, 4
  %v286 = vand.u32 %v284, 15
  %v287 = vsub.s32 0, %v286
  %v288 = vsel %vm282, %v287, %v286
  %vm289 = vcmp.lt.s32.totalorder %v231, 0
  %v290 = vsub.s32 0, %v231
  %v291 = vsel %vm289, %v290, %v231
  %v292 = vshrl.u32 %v291, 4
  %v293 = vand.u32 %v291, 15
  %v294 = vsub.s32 0, %v293
  %v295 = vsel %vm289, %v294, %v293
  %vm296 = vcmp.lt.s32.totalorder %v232, 0
  %v297 = vsub.s32 0, %v232
  %v298 = vsel %vm296, %v297, %v232
  %v299 = vshrl.u32 %v298, 4
  %v300 = vand.u32 %v298, 15
  %v301 = vsub.s32 0, %v300
  %v302 = vsel %vm296, %v301, %v300
  %vm303 = vcmp.lt.s32.totalorder %v233, 0
  %v304 = vsub.s32 0, %v233
  %v305 = vsel %vm303, %v304, %v233
  %v306 = vshrl.u32 %v305, 4
  %v307 = vand.u32 %v305, 15
  %v308 = vsub.s32 0, %v307
  %v309 = vsel %vm303, %v308, %v307
  %vm310 = vcmp.lt.s32.totalorder %v234, 0
  %v311 = vsub.s32 0, %v234
  %v312 = vsel %vm310, %v311, %v234
  %v313 = vshrl.u32 %v312, 4
  %v314 = vand.u32 %v312, 15
  %v315 = vsub.s32 0, %v314
  %v316 = vsel %vm310, %v315, %v314
  %vm317 = vcmp.lt.s32.totalorder %v235, 0
  %v318 = vsub.s32 0, %v235
  %v319 = vsel %vm317, %v318, %v235
  %v320 = vshrl.u32 %v319, 4
  %v321 = vand.u32 %v319, 15
  %v322 = vsub.s32 0, %v321
  %v323 = vsel %vm317, %v322, %v321
  %vm324 = vcmp.lt.s32.totalorder %v236, 0
  %v325 = vsub.s32 0, %v236
  %v326 = vsel %vm324, %v325, %v236
  %v327 = vshrl.u32 %v326, 4
  %v328 = vand.u32 %v326, 15
  %v329 = vsub.s32 0, %v328
  %v330 = vsel %vm324, %v329, %v328
  %vm331 = vcmp.lt.s32.totalorder %v237, 0
  %v332 = vsub.s32 0, %v237
  %v333 = vsel %vm331, %v332, %v237
  %v334 = vshrl.u32 %v333, 4
  %v335 = vand.u32 %v333, 15
  %v336 = vsub.s32 0, %v335
  %v337 = vsel %vm331, %v336, %v335
  %vm338 = vcmp.lt.s32.totalorder %v238, 0
  %v339 = vsub.s32 0, %v238
  %v340 = vsel %vm338, %v339, %v238
  %v341 = vshrl.u32 %v340, 4
  %v342 = vand.u32 %v340, 15
  %v343 = vsub.s32 0, %v342
  %v344 = vsel %vm338, %v343, %v342
  %vm345 = vcmp.lt.s32.totalorder %v239, 0
  %v346 = vsub.s32 0, %v239
  %v347 = vsel %vm345, %v346, %v239
  %v348 = vshrl.u32 %v347, 4
  %v349 = vand.u32 %v347, 15
  %v350 = vsub.s32 0, %v349
  %v351 = vsel %vm345, %v350, %v349
  %vm352 = vcmp.ne.s32.totalorder %v246, 0
  %vm353 = vcmp.ne.s32.totalorder %v253, 0
  %vm354 = vcmp.ne.s32.totalorder %v260, 0
  %vm355 = vcmp.ne.s32.totalorder %v267, 0
  %vm356 = vcmp.ne.s32.totalorder %v274, 0
  %vm357 = vcmp.ne.s32.totalorder %v281, 0
  %vm358 = vcmp.ne.s32.totalorder %v288, 0
  %vm359 = vcmp.ne.s32.totalorder %v295, 0
  %vm360 = vcmp.ne.s32.totalorder %v302, 0
  %vm361 = vcmp.ne.s32.totalorder %v309, 0
  %vm362 = vcmp.ne.s32.totalorder %v316, 0
  %vm363 = vcmp.ne.s32.totalorder %v323, 0
  %vm364 = vcmp.ne.s32.totalorder %v330, 0
  %vm365 = vcmp.ne.s32.totalorder %v337, 0
  %vm366 = vcmp.ne.s32.totalorder %v344, 0
  %vm367 = vcmp.ne.s32.totalorder %v351, 0
  %vm368 = vcmp.lt.s32.totalorder %v246, 0
  %vm369 = vcmp.lt.s32.totalorder %v253, 0
  %vm370 = vcmp.lt.s32.totalorder %v260, 0
  %vm371 = vcmp.lt.s32.totalorder %v267, 0
  %vm372 = vcmp.lt.s32.totalorder %v274, 0
  %vm373 = vcmp.lt.s32.totalorder %v281, 0
  %vm374 = vcmp.lt.s32.totalorder %v288, 0
  %vm375 = vcmp.lt.s32.totalorder %v295, 0
  %vm376 = vcmp.lt.s32.totalorder %v302, 0
  %vm377 = vcmp.lt.s32.totalorder %v309, 0
  %vm378 = vcmp.lt.s32.totalorder %v316, 0
  %vm379 = vcmp.lt.s32.totalorder %v323, 0
  %vm380 = vcmp.lt.s32.totalorder %v330, 0
  %vm381 = vcmp.lt.s32.totalorder %v337, 0
  %vm382 = vcmp.lt.s32.totalorder %v344, 0
  %vm383 = vcmp.lt.s32.totalorder %v351, 0
  %vm384 = vmand %vm368, %vm352
  %vm385 = vmand %vm369, %vm353
  %vm386 = vmand %vm370, %vm354
  %vm387 = vmand %vm371, %vm355
  %vm388 = vmand %vm372, %vm356
  %vm389 = vmand %vm373, %vm357
  %vm390 = vmand %vm374, %vm358
  %vm391 = vmand %vm375, %vm359
  %vm392 = vmand %vm376, %vm360
  %vm393 = vmand %vm377, %vm361
  %vm394 = vmand %vm378, %vm362
  %vm395 = vmand %vm379, %vm363
  %vm396 = vmand %vm380, %vm364
  %vm397 = vmand %vm381, %vm365
  %vm398 = vmand %vm382, %vm366
  %vm399 = vmand %vm383, %vm367
  %v400 = vadd.s32 %v246, 16
  %v401 = vadd.s32 %v253, 16
  %v402 = vadd.s32 %v260, 16
  %v403 = vadd.s32 %v267, 16
  %v404 = vadd.s32 %v274, 16
  %v405 = vadd.s32 %v281, 16
  %v406 = vadd.s32 %v288, 16
  %v407 = vadd.s32 %v295, 16
  %v408 = vadd.s32 %v302, 16
  %v409 = vadd.s32 %v309, 16
  %v410 = vadd.s32 %v316, 16
  %v411 = vadd.s32 %v323, 16
  %v412 = vadd.s32 %v330, 16
  %v413 = vadd.s32 %v337, 16
  %v414 = vadd.s32 %v344, 16
  %v415 = vadd.s32 %v351, 16
  %v416 = vsel %vm384, %v400, %v246
  %v417 = vsel %vm385, %v401, %v253
  %v418 = vsel %vm386, %v402, %v260
  %v419 = vsel %vm387, %v403, %v267
  %v420 = vsel %vm388, %v404, %v274
  %v421 = vsel %vm389, %v405, %v281
  %v422 = vsel %vm390, %v406, %v288
  %v423 = vsel %vm391, %v407, %v295
  %v424 = vsel %vm392, %v408, %v302
  %v425 = vsel %vm393, %v409, %v309
  %v426 = vsel %vm394, %v410, %v316
  %v427 = vsel %vm395, %v411, %v323
  %v428 = vsel %vm396, %v412, %v330
  %v429 = vsel %vm397, %v413, %v337
  %v430 = vsel %vm398, %v414, %v344
  %v431 = vsel %vm399, %v415, %v351
  %vm448 = vcmask 1040384
  %v449 = vrot.slane %v145, 7
  %v450 = vrot.slane %v150, 7
  %v451 = vsel %vm448, %v449, %v450
  %v452 = vrot.slane %v155, 7
  %v453 = vsel %vm448, %v450, %v452
  %v454 = vrot.slane %v160, 7
  %v455 = vsel %vm448, %v452, %v454
  %v456 = vrot.slane %v165, 7
  %v457 = vsel %vm448, %v454, %v456
  %v458 = vrot.slane %v170, 7
  %v459 = vsel %vm448, %v456, %v458
  %v460 = vrot.slane %v175, 7
  %v461 = vsel %vm448, %v458, %v460
  %v462 = vrot.slane %v180, 7
  %v463 = vsel %vm448, %v460, %v462
  %v464 = vrot.slane %v185, 7
  %v465 = vsel %vm448, %v462, %v464
  %v466 = vrot.slane %v190, 7
  %v467 = vsel %vm448, %v464, %v466
  %v468 = vrot.slane %v195, 7
  %v469 = vsel %vm448, %v466, %v468
  %v470 = vrot.slane %v200, 7
  %v471 = vsel %vm448, %v468, %v470
  %v472 = vrot.slane %v205, 7
  %v473 = vsel %vm448, %v470, %v472
  %v474 = vrot.slane %v210, 7
  %v475 = vsel %vm448, %v472, %v474
  %v476 = vrot.slane %v215, 7
  %v477 = vsel %vm448, %v474, %v476
  %v478 = vrot.slane %v220, 7
  %v479 = vsel %vm448, %v476, %v478
  %v496 = vsel %vm448, %v145, %v449
  %vm497 = vcmp.eq.s32.totalorder %v416, 0
  %vm498 = vcmp.eq.s32.totalorder %v417, 0
  %vm499 = vcmp.eq.s32.totalorder %v418, 0
  %vm500 = vcmp.eq.s32.totalorder %v419, 0
  %vm501 = vcmp.eq.s32.totalorder %v420, 0
  %vm502 = vcmp.eq.s32.totalorder %v421, 0
  %vm503 = vcmp.eq.s32.totalorder %v422, 0
  %vm504 = vcmp.eq.s32.totalorder %v423, 0
  %vm505 = vcmp.eq.s32.totalorder %v424, 0
  %vm506 = vcmp.eq.s32.totalorder %v425, 0
  %vm507 = vcmp.eq.s32.totalorder %v426, 0
  %vm508 = vcmp.eq.s32.totalorder %v427, 0
  %vm509 = vcmp.eq.s32.totalorder %v428, 0
  %vm510 = vcmp.eq.s32.totalorder %v429, 0
  %vm511 = vcmp.eq.s32.totalorder %v430, 0
  %vm512 = vcmp.eq.s32.totalorder %v431, 0
  %v513 = vsel %vm497, 1, 0
  %v514 = vsel %vm498, 1, 0
  %v515 = vsel %vm499, 1, 0
  %v516 = vsel %vm500, 1, 0
  %v517 = vsel %vm501, 1, 0
  %v518 = vsel %vm502, 1, 0
  %v519 = vsel %vm503, 1, 0
  %v520 = vsel %vm504, 1, 0
  %v521 = vsel %vm505, 1, 0
  %v522 = vsel %vm506, 1, 0
  %v523 = vsel %vm507, 1, 0
  %v524 = vsel %vm508, 1, 0
  %v525 = vsel %vm509, 1, 0
  %v526 = vsel %vm510, 1, 0
  %v527 = vsel %vm511, 1, 0
  %v528 = vsel %vm512, 1, 0
  %vm529 = vcmp.eq.s32.totalorder %v513, 1
  %vm530 = vcmp.eq.s32.totalorder %v514, 1
  %vm531 = vcmp.eq.s32.totalorder %v515, 1
  %vm532 = vcmp.eq.s32.totalorder %v516, 1
  %vm533 = vcmp.eq.s32.totalorder %v517, 1
  %vm534 = vcmp.eq.s32.totalorder %v518, 1
  %vm535 = vcmp.eq.s32.totalorder %v519, 1
  %vm536 = vcmp.eq.s32.totalorder %v520, 1
  %vm537 = vcmp.eq.s32.totalorder %v521, 1
  %vm538 = vcmp.eq.s32.totalorder %v522, 1
  %vm539 = vcmp.eq.s32.totalorder %v523, 1
  %vm540 = vcmp.eq.s32.totalorder %v524, 1
  %vm541 = vcmp.eq.s32.totalorder %v525, 1
  %vm542 = vcmp.eq.s32.totalorder %v526, 1
  %vm543 = vcmp.eq.s32.totalorder %v527, 1
  %vm544 = vcmp.eq.s32.totalorder %v528, 1
  %v545 = vsel %vm529, %v145, %v496
  %v546 = vsel %vm530, %v150, %v451
  %v547 = vsel %vm531, %v155, %v453
  %v548 = vsel %vm532, %v160, %v455
  %v549 = vsel %vm533, %v165, %v457
  %v550 = vsel %vm534, %v170, %v459
  %v551 = vsel %vm535, %v175, %v461
  %v552 = vsel %vm536, %v180, %v463
  %v553 = vsel %vm537, %v185, %v465
  %v554 = vsel %vm538, %v190, %v467
  %v555 = vsel %vm539, %v195, %v469
  %v556 = vsel %vm540, %v200, %v471
  %v557 = vsel %vm541, %v205, %v473
  %v558 = vsel %vm542, %v210, %v475
  %v559 = vsel %vm543, %v215, %v477
  %v560 = vsel %vm544, %v220, %v479
  %vm561 = vcmask 1046528
  %v562 = vrot.slane %v145, 1
  %v563 = vrot.slane %v150, 1
  %v564 = vsel %vm561, %v562, %v563
  %v565 = vrot.slane %v155, 1
  %v566 = vsel %vm561, %v563, %v565
  %v567 = vrot.slane %v160, 1
  %v568 = vsel %vm561, %v565, %v567
  %v569 = vrot.slane %v165, 1
  %v570 = vsel %vm561, %v567, %v569
  %v571 = vrot.slane %v170, 1
  %v572 = vsel %vm561, %v569, %v571
  %v573 = vrot.slane %v175, 1
  %v574 = vsel %vm561, %v571, %v573
  %v575 = vrot.slane %v180, 1
  %v576 = vsel %vm561, %v573, %v575
  %v577 = vrot.slane %v185, 1
  %v578 = vsel %vm561, %v575, %v577
  %v579 = vrot.slane %v190, 1
  %v580 = vsel %vm561, %v577, %v579
  %v581 = vrot.slane %v195, 1
  %v582 = vsel %vm561, %v579, %v581
  %v583 = vrot.slane %v200, 1
  %v584 = vsel %vm561, %v581, %v583
  %v585 = vrot.slane %v205, 1
  %v586 = vsel %vm561, %v583, %v585
  %v587 = vrot.slane %v210, 1
  %v588 = vsel %vm561, %v585, %v587
  %v589 = vrot.slane %v215, 1
  %v590 = vsel %vm561, %v587, %v589
  %v591 = vrot.slane %v220, 1
  %v592 = vsel %vm561, %v589, %v591
  %v609 = vsel %vm561, %v591, %v220
  %vm610 = vcmp.eq.s32.totalorder %v416, 15
  %vm611 = vcmp.eq.s32.totalorder %v417, 15
  %vm612 = vcmp.eq.s32.totalorder %v418, 15
  %vm613 = vcmp.eq.s32.totalorder %v419, 15
  %vm614 = vcmp.eq.s32.totalorder %v420, 15
  %vm615 = vcmp.eq.s32.totalorder %v421, 15
  %vm616 = vcmp.eq.s32.totalorder %v422, 15
  %vm617 = vcmp.eq.s32.totalorder %v423, 15
  %vm618 = vcmp.eq.s32.totalorder %v424, 15
  %vm619 = vcmp.eq.s32.totalorder %v425, 15
  %vm620 = vcmp.eq.s32.totalorder %v426, 15
  %vm621 = vcmp.eq.s32.totalorder %v427, 15
  %vm622 = vcmp.eq.s32.totalorder %v428, 15
  %vm623 = vcmp.eq.s32.totalorder %v429, 15
  %vm624 = vcmp.eq.s32.totalorder %v430, 15
  %vm625 = vcmp.eq.s32.totalorder %v431, 15
  %v626 = vsel %vm610, 1, 0
  %v627 = vsel %vm611, 1, 0
  %v628 = vsel %vm612, 1, 0
  %v629 = vsel %vm613, 1, 0
  %v630 = vsel %vm614, 1, 0
  %v631 = vsel %vm615, 1, 0
  %v632 = vsel %vm616, 1, 0
  %v633 = vsel %vm617, 1, 0
  %v634 = vsel %vm618, 1, 0
  %v635 = vsel %vm619, 1, 0
  %v636 = vsel %vm620, 1, 0
  %v637 = vsel %vm621, 1, 0
  %v638 = vsel %vm622, 1, 0
  %v639 = vsel %vm623, 1, 0
  %v640 = vsel %vm624, 1, 0
  %v641 = vsel %vm625, 1, 0
  %vm642 = vcmp.eq.s32.totalorder %v626, 1
  %vm643 = vcmp.eq.s32.totalorder %v627, 1
  %vm644 = vcmp.eq.s32.totalorder %v628, 1
  %vm645 = vcmp.eq.s32.totalorder %v629, 1
  %vm646 = vcmp.eq.s32.totalorder %v630, 1
  %vm647 = vcmp.eq.s32.totalorder %v631, 1
  %vm648 = vcmp.eq.s32.totalorder %v632, 1
  %vm649 = vcmp.eq.s32.totalorder %v633, 1
  %vm650 = vcmp.eq.s32.totalorder %v634, 1
  %vm651 = vcmp.eq.s32.totalorder %v635, 1
  %vm652 = vcmp.eq.s32.totalorder %v636, 1
  %vm653 = vcmp.eq.s32.totalorder %v637, 1
  %vm654 = vcmp.eq.s32.totalorder %v638, 1
  %vm655 = vcmp.eq.s32.totalorder %v639, 1
  %vm656 = vcmp.eq.s32.totalorder %v640, 1
  %vm657 = vcmp.eq.s32.totalorder %v641, 1
  %v658 = vsel %vm642, %v145, %v564
  %v659 = vsel %vm643, %v150, %v566
  %v660 = vsel %vm644, %v155, %v568
  %v661 = vsel %vm645, %v160, %v570
  %v662 = vsel %vm646, %v165, %v572
  %v663 = vsel %vm647, %v170, %v574
  %v664 = vsel %vm648, %v175, %v576
  %v665 = vsel %vm649, %v180, %v578
  %v666 = vsel %vm650, %v185, %v580
  %v667 = vsel %vm651, %v190, %v582
  %v668 = vsel %vm652, %v195, %v584
  %v669 = vsel %vm653, %v200, %v586
  %v670 = vsel %vm654, %v205, %v588
  %v671 = vsel %vm655, %v210, %v590
  %v672 = vsel %vm656, %v215, %v592
  %v673 = vsel %vm657, %v220, %v609
  %v674 = vmul.f32 %v545, 0.25
  %v675 = vmul.f32 %v546, 0.25
  %v676 = vmul.f32 %v547, 0.25
  %v677 = vmul.f32 %v548, 0.25
  %v678 = vmul.f32 %v549, 0.25
  %v679 = vmul.f32 %v550, 0.25
  %v680 = vmul.f32 %v551, 0.25
  %v681 = vmul.f32 %v552, 0.25
  %v682 = vmul.f32 %v553, 0.25
  %v683 = vmul.f32 %v554, 0.25
  %v684 = vmul.f32 %v555, 0.25
  %v685 = vmul.f32 %v556, 0.25
  %v686 = vmul.f32 %v557, 0.25
  %v687 = vmul.f32 %v558, 0.25
  %v688 = vmul.f32 %v559, 0.25
  %v689 = vmul.f32 %v560, 0.25
  %v690 = vmul.f32 %v145, 0.75
  %v691 = vmul.f32 %v150, 0.75
  %v692 = vmul.f32 %v155, 0.75
  %v693 = vmul.f32 %v160, 0.75
  %v694 = vmul.f32 %v165, 0.75
  %v695 = vmul.f32 %v170, 0.75
  %v696 = vmul.f32 %v175, 0.75
  %v697 = vmul.f32 %v180, 0.75
  %v698 = vmul.f32 %v185, 0.75
  %v699 = vmul.f32 %v190, 0.75
  %v700 = vmul.f32 %v195, 0.75
  %v701 = vmul.f32 %v200, 0.75
  %v702 = vmul.f32 %v205, 0.75
  %v703 = vmul.f32 %v210, 0.75
  %v704 = vmul.f32 %v215, 0.75
  %v705 = vmul.f32 %v220, 0.75
  %v706 = vadd.f32 %v674, %v690
  %v707 = vadd.f32 %v675, %v691
  %v708 = vadd.f32 %v676, %v692
  %v709 = vadd.f32 %v677, %v693
  %v710 = vadd.f32 %v678, %v694
  %v711 = vadd.f32 %v679, %v695
  %v712 = vadd.f32 %v680, %v696
  %v713 = vadd.f32 %v681, %v697
  %v714 = vadd.f32 %v682, %v698
  %v715 = vadd.f32 %v683, %v699
  %v716 = vadd.f32 %v684, %v700
  %v717 = vadd.f32 %v685, %v701
  %v718 = vadd.f32 %v686, %v702
  %v719 = vadd.f32 %v687, %v703
  %v720 = vadd.f32 %v688, %v704
  %v721 = vadd.f32 %v689, %v705
  %v722 = vmul.f32 %v658, 0.25
  %v723 = vmul.f32 %v659, 0.25
  %v724 = vmul.f32 %v660, 0.25
  %v725 = vmul.f32 %v661, 0.25
  %v726 = vmul.f32 %v662, 0.25
  %v727 = vmul.f32 %v663, 0.25
  %v728 = vmul.f32 %v664, 0.25
  %v729 = vmul.f32 %v665, 0.25
  %v730 = vmul.f32 %v666, 0.25
  %v731 = vmul.f32 %v667, 0.25
  %v732 = vmul.f32 %v668, 0.25
  %v733 = vmul.f32 %v669, 0.25
  %v734 = vmul.f32 %v670, 0.25
  %v735 = vmul.f32 %v671, 0.25
  %v736 = vmul.f32 %v672, 0.25
  %v737 = vmul.f32 %v673, 0.25
  %v738 = vadd.f32 %v690, %v722
  %v739 = vadd.f32 %v691, %v723
  %v740 = vadd.f32 %v692, %v724
  %v741 = vadd.f32 %v693, %v725
  %v742 = vadd.f32 %v694, %v726
  %v743 = vadd.f32 %v695, %v727
  %v744 = vadd.f32 %v696, %v728
  %v745 = vadd.f32 %v697, %v729
  %v746 = vadd.f32 %v698, %v730
  %v747 = vadd.f32 %v699, %v731
  %v748 = vadd.f32 %v700, %v732
  %v749 = vadd.f32 %v701, %v733
  %v750 = vadd.f32 %v702, %v734
  %v751 = vadd.f32 %v703, %v735
  %v752 = vadd.f32 %v704, %v736
  %v753 = vadd.f32 %v705, %v737
  %770 = vrot.lane.b32.xlu0 %v738, 32
  %v771 = vpop.permute.xlu0 %770
  %772 = vrot.lane.b32.xlu0 %v739, 32
  %v773 = vpop.permute.xlu0 %772
  %774 = vrot.lane.b32.xlu0 %v740, 32
  %v775 = vpop.permute.xlu0 %774
  %776 = vrot.lane.b32.xlu0 %v741, 32
  %v777 = vpop.permute.xlu0 %776
  %778 = vrot.lane.b32.xlu0 %v742, 32
  %v779 = vpop.permute.xlu0 %778
  %780 = vrot.lane.b32.xlu0 %v743, 32
  %v781 = vpop.permute.xlu0 %780
  %782 = vrot.lane.b32.xlu0 %v744, 32
  %v783 = vpop.permute.xlu0 %782
  %784 = vrot.lane.b32.xlu0 %v745, 32
  %v785 = vpop.permute.xlu0 %784
  %786 = vrot.lane.b32.xlu0 %v746, 32
  %v787 = vpop.permute.xlu0 %786
  %788 = vrot.lane.b32.xlu0 %v747, 32
  %v789 = vpop.permute.xlu0 %788
  %790 = vrot.lane.b32.xlu0 %v748, 32
  %v791 = vpop.permute.xlu0 %790
  %792 = vrot.lane.b32.xlu0 %v749, 32
  %v793 = vpop.permute.xlu0 %792
  %794 = vrot.lane.b32.xlu0 %v750, 32
  %v795 = vpop.permute.xlu0 %794
  %796 = vrot.lane.b32.xlu0 %v751, 32
  %v797 = vpop.permute.xlu0 %796
  %798 = vrot.lane.b32.xlu0 %v752, 32
  %v799 = vpop.permute.xlu0 %798
  %800 = vrot.lane.b32.xlu0 %v753, 32
  %v801 = vpop.permute.xlu0 %800
  %vm818 = vcmask 261120
  %v819 = vsel %vm818, %v706, %v771
  %v820 = vsel %vm818, %v707, %v773
  %v821 = vsel %vm818, %v708, %v775
  %v822 = vsel %vm818, %v709, %v777
  %v823 = vsel %vm818, %v710, %v779
  %v824 = vsel %vm818, %v711, %v781
  %v825 = vsel %vm818, %v712, %v783
  %v826 = vsel %vm818, %v713, %v785
  %v827 = vsel %vm818, %v714, %v787
  %v828 = vsel %vm818, %v715, %v789
  %v829 = vsel %vm818, %v716, %v791
  %v830 = vsel %vm818, %v717, %v793
  %v831 = vsel %vm818, %v718, %v795
  %v832 = vsel %vm818, %v719, %v797
  %v833 = vsel %vm818, %v720, %v799
  %v834 = vsel %vm818, %v721, %v801
  %vm835 = vcmask 523264
  %836 = vst.msk [vmem:[%s2] sm:$0xff] %vm835, %v819
  %837 = vst.msk [vmem:[%s2 + $0x8] sm:$0xff] %vm835, %v820
  %838 = vst.msk [vmem:[%s2 + $0x10] sm:$0xff] %vm835, %v821
  %839 = vst.msk [vmem:[%s2 + $0x18] sm:$0xff] %vm835, %v822
  %840 = vst.msk [vmem:[%s2 + $0x20] sm:$0xff] %vm835, %v823
  %841 = vst.msk [vmem:[%s2 + $0x28] sm:$0xff] %vm835, %v824
  %842 = vst.msk [vmem:[%s2 + $0x30] sm:$0xff] %vm835, %v825
  %843 = vst.msk [vmem:[%s2 + $0x38] sm:$0xff] %vm835, %v826
  %844 = vst.msk [vmem:[%s2 + $0x40] sm:$0xff] %vm835, %v827
  %845 = vst.msk [vmem:[%s2 + $0x48] sm:$0xff] %vm835, %v828
  %846 = vst.msk [vmem:[%s2 + $0x50] sm:$0xff] %vm835, %v829
  %847 = vst.msk [vmem:[%s2 + $0x58] sm:$0xff] %vm835, %v830
  %848 = vst.msk [vmem:[%s2 + $0x60] sm:$0xff] %vm835, %v831
  %849 = vst.msk [vmem:[%s2 + $0x68] sm:$0xff] %vm835, %v832
  %850 = vst.msk [vmem:[%s2 + $0x70] sm:$0xff] %vm835, %v833
  %851 = vst.msk [vmem:[%s2 + $0x78] sm:$0xff] %vm835, %v834
  // Predicated region
  $region10: #{tpu_custom_call.1} parent=0 // pred_check
    _
  $region11: #{tpu_custom_call.1} parent=0 // pred_check_branch
    %853 = sbr.rel (0) target = $region13
  $region12: #{tpu_custom_call.1} parent=0 // pred_region
    _
  $region13: #{tpu_custom_call.1} parent=0 // pred_fallthru
    _
  // Predicated region
  $region14: #{tpu_custom_call.1} parent=0 // pred_check
    _
  $region15: #{tpu_custom_call.1} parent=0 // pred_check_branch
    %855 = sbr.rel (0) target = $region17
  $region16: #{tpu_custom_call.1} parent=0 // pred_region
    _
  $region17: #{tpu_custom_call.1} parent=0 // pred_fallthru
    _

</llo_original>
